<compile_context>
chip_gen: v7x
topology: tpu7x:2x2x1
jax: 0.10.0
libtpu: 0.0.40
codegen_flags: <defaults>
</compile_context>

<pallas_src>
import functools

import jax
import jax.numpy as jnp
from jax.experimental import pallas as pl
from jax.experimental.pallas import tpu as pltpu

_LANE = 128
_ACC_BUDGET_BYTES = 128 * 1024  # keep the two f32 accumulators <= ~half the vreg file


# ----------------------------------------------------------------------------
# Kernel: one (mode-tile, Co-tile, Ci-tile) grid step of the complex channel mix.
#   a_ref: (2, B, CiT, Mt)    [0]=real, [1]=imag activations
#   w_ref: (2, CiT, CoT, Mt)  [0]=real, [1]=imag weights
#   o_ref: (2, B, CoT, Mt)    f32, accumulated across the (innermost) Ci grid axis
# ----------------------------------------------------------------------------
def _spectral_mul_kernel(a_ref, w_ref, o_ref):
    _, b, cit, mt = a_ref.shape
    cot = w_ref.shape[2]

    acc_r = jnp.zeros((b, cot, mt), jnp.float32)
    acc_i = jnp.zeros((b, cot, mt), jnp.float32)

    # Static, bounded unroll over the in-channel tile (CiT <= 32): every index is
    # a compile-time constant, so loads are cheap static slices (no dynamic
    # sublane indexing, no blown-up live ranges).
    for i in range(cit):
        a_r = a_ref[0, :, i:i + 1, :]          # (B, 1, Mt)
        a_i = a_ref[1, :, i:i + 1, :]
        w_r = w_ref[0, i][None, :, :]          # (1, CoT, Mt)
        w_i = w_ref[1, i][None, :, :]
        # Products in the input dtype (f32, or bf16 on the bf16 path); f32 accumulation.
        acc_r = acc_r + (a_r * w_r - a_i * w_i).astype(jnp.float32)
        acc_i = acc_i + (a_r * w_i + a_i * w_r).astype(jnp.float32)

    ci_step = pl.program_id(2)

    @pl.when(ci_step == 0)
    def _():
        o_ref[0] = acc_r
        o_ref[1] = acc_i

    @pl.when(ci_step != 0)
    def _():
        o_ref[0] = o_ref[0] + acc_r
        o_ref[1] = o_ref[1] + acc_i


# ----------------------------------------------------------------------------
# Tiling / budgeting heuristics.
# ----------------------------------------------------------------------------
def _vmem_budget_bytes():
    """Generation-aware scoped-VMEM budget (leave headroom; never ask for all of it)."""
    phys = 64 * 1024 * 1024
    try:
        info = pltpu.get_tpu_info()
        phys = int(getattr(info, "vmem_capacity_bytes", phys) or phys)
    except Exception:
        pass
    if phys <= 64 * 1024 * 1024:                     # v7x-class (64 MiB per TC)
        return min(48 * 1024 * 1024, (phys * 3) // 4)
    return 100 * 1024 * 1024                         # v5e / v6e (128 MiB)


def _choose_ci_tile(ci):
    """In-channel tile: full extent if small/ragged, else a multiple-of-8 divisor <= 32."""
    if ci <= 16 or ci % 8 != 0:
        return ci                                    # full-extent block (exempt from 8-rule)
    for cand in (32, 16, 8):
        if ci % cand == 0:
            return cand
    return ci


def _choose_co_tile(co, b, mt):
    """Largest Co tile (multiple of 8, or Co itself) whose f32 accumulators fit the budget."""
    cands = sorted({d for d in range(8, co + 1, 8) if co % d == 0} | {co})
    best = cands[0]
    for c in cands:
        if 2 * b * c * mt * 4 <= _ACC_BUDGET_BYTES:
            best = c
    return best


def _choose_mode_tile(m, max_tile=512, min_steps=4):
    """Pick (mode_tile, padded_M): lane-dense, and prefer >= min_steps grid steps."""
    if m < _LANE:
        return _LANE, _LANE                          # pad tiny M to one lane-dense block
    if m % _LANE == 0:
        cands = [t for t in (512, 256, 128) if t <= max_tile and m % t == 0]
        if cands:
            # Prefer enough grid steps for megacore + double-buffer overlap,
            # then the largest tile (DMA efficiency).
            best = max(cands, key=lambda t: (min(m // t, min_steps), t))
            return best, m
    if m <= max_tile:
        return m, m                                  # ragged but small: full-extent block
    mt = min(256, max_tile)
    return mt, ((m + mt - 1) // mt) * mt             # rare fallback: pad then tile


# ----------------------------------------------------------------------------
# Wrapper around pallas_call.
# ----------------------------------------------------------------------------
def _spectral_mul_pallas(a, w, *, use_bf16=False):
    """Complex channel mixing over retained Fourier modes.

    a: (2, B, Ci, M) f32   (real/imag activation planes, natural B-leading layout)
    w: (2, Ci, Co, M) f32  (real/imag weight planes)
    returns (2, B, Co, M) f32.
    """
    _, b, ci, m = a.shape
    co = w.shape[2]

    cit = _choose_ci_tile(ci)
    mt, mp = _choose_mode_tile(m)
    cot = _choose_co_tile(co, b, mt)

    in_dtype = jnp.bfloat16 if use_bf16 else jnp.float32
    in_sz = 2 if use_bf16 else 4
    budget = _vmem_budget_bytes()

    def _need(mt_):
        a_blk = 2 * b * cit * mt_ * in_sz
        w_blk = 2 * cit * cot * mt_ * in_sz
        o_blk = 2 * b * cot * mt_ * 4
        return 2 * (a_blk + w_blk + o_blk)           # double-buffered inputs + outputs

    # Shrink the mode tile if the double-buffered working set would exceed the budget.
    while _need(mt) > budget and mt % 256 == 0:
        mt //= 2

    if mp != m:                                      # pad once on the stacked operands
        pad = mp - m
        a = jnp.pad(a, ((0, 0), (0, 0), (0, 0), (0, pad)))
        w = jnp.pad(w, ((0, 0), (0, 0), (0, 0), (0, pad)))

    if use_bf16:                                     # bf16 DMA/VPU path (v6e/v7x); f32 accum
        a = a.astype(in_dtype)
        w = w.astype(in_dtype)

    grid = (mp // mt, co // cot, ci // cit)          # (modes, Co) parallel, Ci reduction last

    a_spec = pl.BlockSpec((2, b, cit, mt), lambda mi, coi, cii: (0, 0, cii, mi))
    w_spec = pl.BlockSpec((2, cit, cot, mt), lambda mi, coi, cii: (0, cii, coi, mi))
    o_spec = pl.BlockSpec((2, b, cot, mt), lambda mi, coi, cii: (0, 0, coi, mi))

    vmem_limit = int(min(budget, max(32 * 1024 * 1024, 2 * _need(mt))))

    out = pl.pallas_call(
        _spectral_mul_kernel,
        out_shape=jax.ShapeDtypeStruct((2, b, co, mp), jnp.float32),
        grid=grid,
        in_specs=[a_spec, w_spec],
        out_specs=o_spec,
        compiler_params=pltpu.CompilerParams(
            dimension_semantics=("parallel", "parallel", "arbitrary"),
            vmem_limit_bytes=vmem_limit,
        ),
    )(a, w)

    if mp != m:
        out = out[..., :m]
    return out


# ----------------------------------------------------------------------------
# SpectralConv3d forward (matches the PyTorch module's forward semantics).
# ----------------------------------------------------------------------------
def spectral_conv3d(x, weights, modes1, modes2, modes3, *, use_bf16=False):
    """x: (B, Cin, D1, D2, D3) f32; weights: (Cin, Cout, m1, m2, m3) complex64."""
    B, Cin, D1, D2, D3 = x.shape
    Cout = weights.shape[1]

    # TODO(synk): rfftn/irfftn have no Pallas primitive; they stay in plain JAX/XLA.
    x_ft = jnp.fft.rfftn(x, axes=(2, 3, 4))           # (B, Cin, D1, D2, D3//2+1) c64

    m1 = min(modes1, x_ft.shape[2])
    m2 = min(modes2, x_ft.shape[3])
    m3 = min(modes3, x_ft.shape[4])
    M = m1 * m2 * m3

    # Natural (B, Ci, M) layout — no host-side transpose.  Real/imag planes are
    # stacked into one leading axis so each operand is a single DMA stream.
    a_c = x_ft[:, :, :m1, :m2, :m3].reshape(B, Cin, M)
    a = jnp.stack([jnp.real(a_c), jnp.imag(a_c)]).astype(jnp.float32)   # (2, B, Ci, M)

    w_c = weights[:, :, :m1, :m2, :m3].reshape(Cin, Cout, M)
    w = jnp.stack([jnp.real(w_c), jnp.imag(w_c)]).astype(jnp.float32)   # (2, Ci, Co, M)

    o = _spectral_mul_pallas(a, w, use_bf16=use_bf16)                   # (2, B, Co, M)
    out_modes = jax.lax.complex(o[0], o[1]).reshape(B, Cout, m1, m2, m3)

    out_ft = jnp.zeros((B, Cout, D1, D2, D3 // 2 + 1), dtype=jnp.complex64)
    out_ft = out_ft.at[:, :, :m1, :m2, :m3].set(out_modes)
    return jnp.fft.irfftn(out_ft, s=(D1, D2, D3), axes=(2, 3, 4))


# Pure-JAX reference (mirrors the PyTorch module exactly).
def spectral_conv3d_ref(x, weights, modes1, modes2, modes3):
    B, Cin, D1, D2, D3 = x.shape
    Cout = weights.shape[1]
    x_ft = jnp.fft.rfftn(x, axes=(2, 3, 4))
    m1 = min(modes1, x_ft.shape[2])
    m2 = min(modes2, x_ft.shape[3])
    m3 = min(modes3, x_ft.shape[4])
    out_modes = jnp.einsum(
        "bixyz,ioxyz->boxyz",
        x_ft[:, :, :m1, :m2, :m3],
        weights[:, :, :m1, :m2, :m3],
    )
    out_ft = jnp.zeros((B, Cout, D1, D2, D3 // 2 + 1), dtype=jnp.complex64)
    out_ft = out_ft.at[:, :, :m1, :m2, :m3].set(out_modes.astype(jnp.complex64))
    return jnp.fft.irfftn(out_ft, s=(D1, D2, D3), axes=(2, 3, 4))


def _make_inputs(key, B, Cin, Cout, dims, modes):
    kx, kwr, kwi = jax.random.split(key, 3)
    x = jax.random.normal(kx, (B, Cin) + dims, dtype=jnp.float32)
    scale = 1.0 / (Cin * Cout)
    w_r = scale * jax.random.normal(kwr, (Cin, Cout) + modes, dtype=jnp.float32)
    w_i = scale * jax.random.normal(kwi, (Cin, Cout) + modes, dtype=jnp.float32)
    weights = (w_r + 1j * w_i).astype(jnp.complex64)
    return x, weights


if __name__ == "__main__":
    key = jax.random.PRNGKey(0)
    k1, k2 = jax.random.split(key)

    # Case 1: tiny mode count (M = 64 < 128 -> padded to one lane-dense 128 block).
    B, Cin, Cout = 2, 4, 4
    dims, modes = (16, 16, 16), (4, 4, 4)
    x, weights = _make_inputs(k1, B, Cin, Cout, dims, modes)
    fwd = jax.jit(functools.partial(spectral_conv3d,
                                    modes1=modes[0], modes2=modes[1], modes3=modes[2]))
    out = jax.block_until_ready(fwd(x, weights))
    ref = spectral_conv3d_ref(x, weights, *modes)
    assert out.shape == (B, Cout) + dims, out.shape
    assert jnp.allclose(out, ref, rtol=1e-4, atol=1e-4), "mismatch vs reference (case 1)"

    # Case 2: larger channel/mode counts -> exercises the mode-tile grid
    # (M=1024 -> 4 x 256 tiles) and the Ci reduction grid axis (Ci=24 -> 3 x 8).
    B2, Cin2, Cout2 = 2, 24, 16
    dims2, modes_2 = (16, 16, 32), (8, 8, 16)
    x2, weights2 = _make_inputs(k2, B2, Cin2, Cout2, dims2, modes_2)
    fwd2 = jax.jit(functools.partial(spectral_conv3d,
                                     modes1=modes_2[0], modes2=modes_2[1], modes3=modes_2[2]))
    out2 = jax.block_until_ready(fwd2(x2, weights2))
    ref2 = spectral_conv3d_ref(x2, weights2, *modes_2)
    assert out2.shape == (B2, Cout2) + dims2, out2.shape
    assert jnp.allclose(out2, ref2, rtol=1e-4, atol=1e-4), "mismatch vs reference (case 2)"

    # Case 3: optional bf16 input path (intended for v6e/v7x; keep f32 on v5e).
    # Accumulation stays f32; check against the f32 reference at bf16-level tolerance.
    fwd3 = jax.jit(functools.partial(spectral_conv3d, use_bf16=True,
                                     modes1=modes_2[0], modes2=modes_2[1], modes3=modes_2[2]))
    out3 = jax.block_until_ready(fwd3(x2, weights2))
    rel_err = jnp.max(jnp.abs(out3 - ref2)) / (jnp.max(jnp.abs(ref2)) + 1e-12)
    assert out3.shape == (B2, Cout2) + dims2, out3.shape
    assert rel_err < 5e-2, f"bf16 path error too large: {rel_err}"

    print("KERNEL_OK")
</pallas_src>

<mosaic_0001>
module attributes {stable_mosaic.version = 11 : i64} {
  func.func @_spectral_mul_kernel(%arg0: i32, %arg1: i32, %arg2: i32, %arg3: memref<2x2x4x128xf32, #tpu.memory_space<vmem>>, %arg4: memref<2x4x4x128xf32, #tpu.memory_space<vmem>>, %arg5: memref<2x2x4x128xf32, #tpu.memory_space<vmem>>) attributes {dimension_semantics = [#tpu.dimension_semantics<parallel>, #tpu.dimension_semantics<parallel>, #tpu.dimension_semantics<arbitrary>], iteration_bounds = array<i64: 1, 1, 1>, scalar_prefetch = 0 : i64, scratch_operands = 0 : i64, tpu.core_type = #tpu.core_type<tc>, window_params = [{transform_indices = @transform_0, window_bounds = array<i64: 2, 2, 4, 128>}, {transform_indices = @transform_1, window_bounds = array<i64: 2, 4, 4, 128>}, {transform_indices = @transform_2, window_bounds = array<i64: 2, 2, 4, 128>}]} {
    %cst = arith.constant 0.000000e+00 : f32
    %0 = vector.broadcast %cst : f32 to vector<2x4x128xf32>
    %cst_0 = arith.constant 0.000000e+00 : f32
    %1 = vector.broadcast %cst_0 : f32 to vector<2x4x128xf32>
    %c0 = arith.constant 0 : index
    %c0_1 = arith.constant 0 : index
    %c0_2 = arith.constant 0 : index
    %c0_3 = arith.constant 0 : index
    %2 = vector.load %arg3[%c0, %c0_1, %c0_2, %c0_3] : memref<2x2x4x128xf32, #tpu.memory_space<vmem>>, vector<1x2x1x128xf32>
    %3 = vector.shape_cast %2 : vector<1x2x1x128xf32> to vector<2x1x128xf32>
    %c1 = arith.constant 1 : index
    %c0_4 = arith.constant 0 : index
    %c0_5 = arith.constant 0 : index
    %c0_6 = arith.constant 0 : index
    %4 = vector.load %arg3[%c1, %c0_4, %c0_5, %c0_6] : memref<2x2x4x128xf32, #tpu.memory_space<vmem>>, vector<1x2x1x128xf32>
    %5 = vector.shape_cast %4 : vector<1x2x1x128xf32> to vector<2x1x128xf32>
    %c0_7 = arith.constant 0 : index
    %c0_8 = arith.constant 0 : index
    %c0_9 = arith.constant 0 : index
    %c0_10 = arith.constant 0 : index
    %6 = vector.load %arg4[%c0_7, %c0_8, %c0_9, %c0_10] : memref<2x4x4x128xf32, #tpu.memory_space<vmem>>, vector<1x1x4x128xf32>
    %7 = vector.shape_cast %6 : vector<1x1x4x128xf32> to vector<4x128xf32>
    %8 = vector.shape_cast %7 : vector<4x128xf32> to vector<1x4x128xf32>
    %c1_11 = arith.constant 1 : index
    %c0_12 = arith.constant 0 : index
    %c0_13 = arith.constant 0 : index
    %c0_14 = arith.constant 0 : index
    %9 = vector.load %arg4[%c1_11, %c0_12, %c0_13, %c0_14] : memref<2x4x4x128xf32, #tpu.memory_space<vmem>>, vector<1x1x4x128xf32>
    %10 = vector.shape_cast %9 : vector<1x1x4x128xf32> to vector<4x128xf32>
    %11 = vector.shape_cast %10 : vector<4x128xf32> to vector<1x4x128xf32>
    %12 = vector.broadcast %3 : vector<2x1x128xf32> to vector<2x4x128xf32>
    %13 = vector.broadcast %8 : vector<1x4x128xf32> to vector<2x4x128xf32>
    %14 = arith.mulf %12, %13 : vector<2x4x128xf32>
    %15 = vector.broadcast %5 : vector<2x1x128xf32> to vector<2x4x128xf32>
    %16 = vector.broadcast %11 : vector<1x4x128xf32> to vector<2x4x128xf32>
    %17 = arith.mulf %15, %16 : vector<2x4x128xf32>
    %18 = arith.subf %14, %17 : vector<2x4x128xf32>
    %19 = arith.addf %0, %18 : vector<2x4x128xf32>
    %20 = vector.broadcast %3 : vector<2x1x128xf32> to vector<2x4x128xf32>
    %21 = vector.broadcast %11 : vector<1x4x128xf32> to vector<2x4x128xf32>
    %22 = arith.mulf %20, %21 : vector<2x4x128xf32>
    %23 = vector.broadcast %5 : vector<2x1x128xf32> to vector<2x4x128xf32>
    %24 = vector.broadcast %8 : vector<1x4x128xf32> to vector<2x4x128xf32>
    %25 = arith.mulf %23, %24 : vector<2x4x128xf32>
    %26 = arith.addf %22, %25 : vector<2x4x128xf32>
    %27 = arith.addf %1, %26 : vector<2x4x128xf32>
    %c0_15 = arith.constant 0 : index
    %c0_16 = arith.constant 0 : index
    %c1_17 = arith.constant 1 : index
    %c0_18 = arith.constant 0 : index
    %28 = vector.load %arg3[%c0_15, %c0_16, %c1_17, %c0_18] : memref<2x2x4x128xf32, #tpu.memory_space<vmem>>, vector<1x2x1x128xf32>
    %29 = vector.shape_cast %28 : vector<1x2x1x128xf32> to vector<2x1x128xf32>
    %c1_19 = arith.constant 1 : index
    %c0_20 = arith.constant 0 : index
    %c1_21 = arith.constant 1 : index
    %c0_22 = arith.constant 0 : index
    %30 = vector.load %arg3[%c1_19, %c0_20, %c1_21, %c0_22] : memref<2x2x4x128xf32, #tpu.memory_space<vmem>>, vector<1x2x1x128xf32>
    %31 = vector.shape_cast %30 : vector<1x2x1x128xf32> to vector<2x1x128xf32>
    %c0_23 = arith.constant 0 : index
    %c1_24 = arith.constant 1 : index
    %c0_25 = arith.constant 0 : index
    %c0_26 = arith.constant 0 : index
    %32 = vector.load %arg4[%c0_23, %c1_24, %c0_25, %c0_26] : memref<2x4x4x128xf32, #tpu.memory_space<vmem>>, vector<1x1x4x128xf32>
    %33 = vector.shape_cast %32 : vector<1x1x4x128xf32> to vector<4x128xf32>
    %34 = vector.shape_cast %33 : vector<4x128xf32> to vector<1x4x128xf32>
    %c1_27 = arith.constant 1 : index
    %c1_28 = arith.constant 1 : index
    %c0_29 = arith.constant 0 : index
    %c0_30 = arith.constant 0 : index
    %35 = vector.load %arg4[%c1_27, %c1_28, %c0_29, %c0_30] : memref<2x4x4x128xf32, #tpu.memory_space<vmem>>, vector<1x1x4x128xf32>
    %36 = vector.shape_cast %35 : vector<1x1x4x128xf32> to vector<4x128xf32>
    %37 = vector.shape_cast %36 : vector<4x128xf32> to vector<1x4x128xf32>
    %38 = vector.broadcast %29 : vector<2x1x128xf32> to vector<2x4x128xf32>
    %39 = vector.broadcast %34 : vector<1x4x128xf32> to vector<2x4x128xf32>
    %40 = arith.mulf %38, %39 : vector<2x4x128xf32>
    %41 = vector.broadcast %31 : vector<2x1x128xf32> to vector<2x4x128xf32>
    %42 = vector.broadcast %37 : vector<1x4x128xf32> to vector<2x4x128xf32>
    %43 = arith.mulf %41, %42 : vector<2x4x128xf32>
    %44 = arith.subf %40, %43 : vector<2x4x128xf32>
    %45 = arith.addf %19, %44 : vector<2x4x128xf32>
    %46 = vector.broadcast %29 : vector<2x1x128xf32> to vector<2x4x128xf32>
    %47 = vector.broadcast %37 : vector<1x4x128xf32> to vector<2x4x128xf32>
    %48 = arith.mulf %46, %47 : vector<2x4x128xf32>
    %49 = vector.broadcast %31 : vector<2x1x128xf32> to vector<2x4x128xf32>
    %50 = vector.broadcast %34 : vector<1x4x128xf32> to vector<2x4x128xf32>
    %51 = arith.mulf %49, %50 : vector<2x4x128xf32>
    %52 = arith.addf %48, %51 : vector<2x4x128xf32>
    %53 = arith.addf %27, %52 : vector<2x4x128xf32>
    %c0_31 = arith.constant 0 : index
    %c0_32 = arith.constant 0 : index
    %c2 = arith.constant 2 : index
    %c0_33 = arith.constant 0 : index
    %54 = vector.load %arg3[%c0_31, %c0_32, %c2, %c0_33] : memref<2x2x4x128xf32, #tpu.memory_space<vmem>>, vector<1x2x1x128xf32>
    %55 = vector.shape_cast %54 : vector<1x2x1x128xf32> to vector<2x1x128xf32>
    %c1_34 = arith.constant 1 : index
    %c0_35 = arith.constant 0 : index
    %c2_36 = arith.constant 2 : index
    %c0_37 = arith.constant 0 : index
    %56 = vector.load %arg3[%c1_34, %c0_35, %c2_36, %c0_37] : memref<2x2x4x128xf32, #tpu.memory_space<vmem>>, vector<1x2x1x128xf32>
    %57 = vector.shape_cast %56 : vector<1x2x1x128xf32> to vector<2x1x128xf32>
    %c0_38 = arith.constant 0 : index
    %c2_39 = arith.constant 2 : index
    %c0_40 = arith.constant 0 : index
    %c0_41 = arith.constant 0 : index
    %58 = vector.load %arg4[%c0_38, %c2_39, %c0_40, %c0_41] : memref<2x4x4x128xf32, #tpu.memory_space<vmem>>, vector<1x1x4x128xf32>
    %59 = vector.shape_cast %58 : vector<1x1x4x128xf32> to vector<4x128xf32>
    %60 = vector.shape_cast %59 : vector<4x128xf32> to vector<1x4x128xf32>
    %c1_42 = arith.constant 1 : index
    %c2_43 = arith.constant 2 : index
    %c0_44 = arith.constant 0 : index
    %c0_45 = arith.constant 0 : index
    %61 = vector.load %arg4[%c1_42, %c2_43, %c0_44, %c0_45] : memref<2x4x4x128xf32, #tpu.memory_space<vmem>>, vector<1x1x4x128xf32>
    %62 = vector.shape_cast %61 : vector<1x1x4x128xf32> to vector<4x128xf32>
    %63 = vector.shape_cast %62 : vector<4x128xf32> to vector<1x4x128xf32>
    %64 = vector.broadcast %55 : vector<2x1x128xf32> to vector<2x4x128xf32>
    %65 = vector.broadcast %60 : vector<1x4x128xf32> to vector<2x4x128xf32>
    %66 = arith.mulf %64, %65 : vector<2x4x128xf32>
    %67 = vector.broadcast %57 : vector<2x1x128xf32> to vector<2x4x128xf32>
    %68 = vector.broadcast %63 : vector<1x4x128xf32> to vector<2x4x128xf32>
    %69 = arith.mulf %67, %68 : vector<2x4x128xf32>
    %70 = arith.subf %66, %69 : vector<2x4x128xf32>
    %71 = arith.addf %45, %70 : vector<2x4x128xf32>
    %72 = vector.broadcast %55 : vector<2x1x128xf32> to vector<2x4x128xf32>
    %73 = vector.broadcast %63 : vector<1x4x128xf32> to vector<2x4x128xf32>
    %74 = arith.mulf %72, %73 : vector<2x4x128xf32>
    %75 = vector.broadcast %57 : vector<2x1x128xf32> to vector<2x4x128xf32>
    %76 = vector.broadcast %60 : vector<1x4x128xf32> to vector<2x4x128xf32>
    %77 = arith.mulf %75, %76 : vector<2x4x128xf32>
    %78 = arith.addf %74, %77 : vector<2x4x128xf32>
    %79 = arith.addf %53, %78 : vector<2x4x128xf32>
    %c0_46 = arith.constant 0 : index
    %c0_47 = arith.constant 0 : index
    %c3 = arith.constant 3 : index
    %c0_48 = arith.constant 0 : index
    %80 = vector.load %arg3[%c0_46, %c0_47, %c3, %c0_48] : memref<2x2x4x128xf32, #tpu.memory_space<vmem>>, vector<1x2x1x128xf32>
    %81 = vector.shape_cast %80 : vector<1x2x1x128xf32> to vector<2x1x128xf32>
    %c1_49 = arith.constant 1 : index
    %c0_50 = arith.constant 0 : index
    %c3_51 = arith.constant 3 : index
    %c0_52 = arith.constant 0 : index
    %82 = vector.load %arg3[%c1_49, %c0_50, %c3_51, %c0_52] : memref<2x2x4x128xf32, #tpu.memory_space<vmem>>, vector<1x2x1x128xf32>
    %83 = vector.shape_cast %82 : vector<1x2x1x128xf32> to vector<2x1x128xf32>
    %c0_53 = arith.constant 0 : index
    %c3_54 = arith.constant 3 : index
    %c0_55 = arith.constant 0 : index
    %c0_56 = arith.constant 0 : index
    %84 = vector.load %arg4[%c0_53, %c3_54, %c0_55, %c0_56] : memref<2x4x4x128xf32, #tpu.memory_space<vmem>>, vector<1x1x4x128xf32>
    %85 = vector.shape_cast %84 : vector<1x1x4x128xf32> to vector<4x128xf32>
    %86 = vector.shape_cast %85 : vector<4x128xf32> to vector<1x4x128xf32>
    %c1_57 = arith.constant 1 : index
    %c3_58 = arith.constant 3 : index
    %c0_59 = arith.constant 0 : index
    %c0_60 = arith.constant 0 : index
    %87 = vector.load %arg4[%c1_57, %c3_58, %c0_59, %c0_60] : memref<2x4x4x128xf32, #tpu.memory_space<vmem>>, vector<1x1x4x128xf32>
    %88 = vector.shape_cast %87 : vector<1x1x4x128xf32> to vector<4x128xf32>
    %89 = vector.shape_cast %88 : vector<4x128xf32> to vector<1x4x128xf32>
    %90 = vector.broadcast %81 : vector<2x1x128xf32> to vector<2x4x128xf32>
    %91 = vector.broadcast %86 : vector<1x4x128xf32> to vector<2x4x128xf32>
    %92 = arith.mulf %90, %91 : vector<2x4x128xf32>
    %93 = vector.broadcast %83 : vector<2x1x128xf32> to vector<2x4x128xf32>
    %94 = vector.broadcast %89 : vector<1x4x128xf32> to vector<2x4x128xf32>
    %95 = arith.mulf %93, %94 : vector<2x4x128xf32>
    %96 = arith.subf %92, %95 : vector<2x4x128xf32>
    %97 = arith.addf %71, %96 : vector<2x4x128xf32>
    %98 = vector.broadcast %81 : vector<2x1x128xf32> to vector<2x4x128xf32>
    %99 = vector.broadcast %89 : vector<1x4x128xf32> to vector<2x4x128xf32>
    %100 = arith.mulf %98, %99 : vector<2x4x128xf32>
    %101 = vector.broadcast %83 : vector<2x1x128xf32> to vector<2x4x128xf32>
    %102 = vector.broadcast %86 : vector<1x4x128xf32> to vector<2x4x128xf32>
    %103 = arith.mulf %101, %102 : vector<2x4x128xf32>
    %104 = arith.addf %100, %103 : vector<2x4x128xf32>
    %105 = arith.addf %79, %104 : vector<2x4x128xf32>
    %c0_i32 = arith.constant 0 : i32
    %106 = arith.cmpi eq, %arg2, %c0_i32 : i32
    %107 = arith.extui %106 : i1 to i32
    %c0_i32_61 = arith.constant 0 : i32
    %108 = arith.cmpi ne, %107, %c0_i32_61 : i32
    scf.if %108 {
      %c0_64 = arith.constant 0 : index
      %c0_65 = arith.constant 0 : index
      %c0_66 = arith.constant 0 : index
      %c0_67 = arith.constant 0 : index
      %112 = vector.load %arg5[%c0_64, %c0_65, %c0_66, %c0_67] : memref<2x2x4x128xf32, #tpu.memory_space<vmem>>, vector<1x2x4x128xf32>
      %113 = vector.shape_cast %112 : vector<1x2x4x128xf32> to vector<2x4x128xf32>
      %114 = vector.shape_cast %97 : vector<2x4x128xf32> to vector<1x2x4x128xf32>
      tpu.vector_store %arg5[%c0_64, %c0_65, %c0_66, %c0_67], %114 {strides = array<i32>} : memref<2x2x4x128xf32, #tpu.memory_space<vmem>>, vector<1x2x4x128xf32>,
      %c1_68 = arith.constant 1 : index
      %c0_69 = arith.constant 0 : index
      %c0_70 = arith.constant 0 : index
      %c0_71 = arith.constant 0 : index
      %115 = vector.load %arg5[%c1_68, %c0_69, %c0_70, %c0_71] : memref<2x2x4x128xf32, #tpu.memory_space<vmem>>, vector<1x2x4x128xf32>
      %116 = vector.shape_cast %115 : vector<1x2x4x128xf32> to vector<2x4x128xf32>
      %117 = vector.shape_cast %105 : vector<2x4x128xf32> to vector<1x2x4x128xf32>
      tpu.vector_store %arg5[%c1_68, %c0_69, %c0_70, %c0_71], %117 {strides = array<i32>} : memref<2x2x4x128xf32, #tpu.memory_space<vmem>>, vector<1x2x4x128xf32>,
    } else {
    }
    %c0_i32_62 = arith.constant 0 : i32
    %109 = arith.cmpi ne, %arg2, %c0_i32_62 : i32
    %110 = arith.extui %109 : i1 to i32
    %c0_i32_63 = arith.constant 0 : i32
    %111 = arith.cmpi ne, %110, %c0_i32_63 : i32
    scf.if %111 {
      %c0_64 = arith.constant 0 : index
      %c0_65 = arith.constant 0 : index
      %c0_66 = arith.constant 0 : index
      %c0_67 = arith.constant 0 : index
      %112 = vector.load %arg5[%c0_64, %c0_65, %c0_66, %c0_67] : memref<2x2x4x128xf32, #tpu.memory_space<vmem>>, vector<1x2x4x128xf32>
      %113 = vector.shape_cast %112 : vector<1x2x4x128xf32> to vector<2x4x128xf32>
      %114 = arith.addf %113, %97 : vector<2x4x128xf32>
      %c0_68 = arith.constant 0 : index
      %c0_69 = arith.constant 0 : index
      %c0_70 = arith.constant 0 : index
      %c0_71 = arith.constant 0 : index
      %115 = vector.load %arg5[%c0_68, %c0_69, %c0_70, %c0_71] : memref<2x2x4x128xf32, #tpu.memory_space<vmem>>, vector<1x2x4x128xf32>
      %116 = vector.shape_cast %115 : vector<1x2x4x128xf32> to vector<2x4x128xf32>
      %117 = vector.shape_cast %114 : vector<2x4x128xf32> to vector<1x2x4x128xf32>
      tpu.vector_store %arg5[%c0_68, %c0_69, %c0_70, %c0_71], %117 {strides = array<i32>} : memref<2x2x4x128xf32, #tpu.memory_space<vmem>>, vector<1x2x4x128xf32>,
      %c1_72 = arith.constant 1 : index
      %c0_73 = arith.constant 0 : index
      %c0_74 = arith.constant 0 : index
      %c0_75 = arith.constant 0 : index
      %118 = vector.load %arg5[%c1_72, %c0_73, %c0_74, %c0_75] : memref<2x2x4x128xf32, #tpu.memory_space<vmem>>, vector<1x2x4x128xf32>
      %119 = vector.shape_cast %118 : vector<1x2x4x128xf32> to vector<2x4x128xf32>
      %120 = arith.addf %119, %105 : vector<2x4x128xf32>
      %c1_76 = arith.constant 1 : index
      %c0_77 = arith.constant 0 : index
      %c0_78 = arith.constant 0 : index
      %c0_79 = arith.constant 0 : index
      %121 = vector.load %arg5[%c1_76, %c0_77, %c0_78, %c0_79] : memref<2x2x4x128xf32, #tpu.memory_space<vmem>>, vector<1x2x4x128xf32>
      %122 = vector.shape_cast %121 : vector<1x2x4x128xf32> to vector<2x4x128xf32>
      %123 = vector.shape_cast %120 : vector<2x4x128xf32> to vector<1x2x4x128xf32>
      tpu.vector_store %arg5[%c1_76, %c0_77, %c0_78, %c0_79], %123 {strides = array<i32>} : memref<2x2x4x128xf32, #tpu.memory_space<vmem>>, vector<1x2x4x128xf32>,
    } else {
    }
    return
  }
  func.func @transform_0(%arg0: i32, %arg1: i32, %arg2: i32) -> (i32, i32, i32, i32) {
    %c0_i32 = arith.constant 0 : i32
    %c0_i32_0 = arith.constant 0 : i32
    %c0_i32_1 = arith.constant 0 : i32
    return %c0_i32, %c0_i32_0, %arg2, %arg0 : i32, i32, i32, i32
  }
  func.func @transform_1(%arg0: i32, %arg1: i32, %arg2: i32) -> (i32, i32, i32, i32) {
    %c0_i32 = arith.constant 0 : i32
    %c0_i32_0 = arith.constant 0 : i32
    return %c0_i32, %arg2, %arg1, %arg0 : i32, i32, i32, i32
  }
  func.func @transform_2(%arg0: i32, %arg1: i32, %arg2: i32) -> (i32, i32, i32, i32) {
    %c0_i32 = arith.constant 0 : i32
    %c0_i32_0 = arith.constant 0 : i32
    %c0_i32_1 = arith.constant 0 : i32
    return %c0_i32, %c0_i32_0, %arg1, %arg0 : i32, i32, i32, i32
  }
}

</mosaic_0001>

<llo_original>
// kernel: custom-call
$region0: #{custom-call}
  %s0 = inlined_call_operand.hbm [shape: c64[4,4,4,4,4], index: 0, kind: input, shape index: {}]
  %s1 = inlined_call_operand.vmem [shape: f32[4,4,4,4,4], index: 1, kind: output, shape index: {}]
  $region1: #{custom-call} parent=0
    #allocation0 [shape = 's32[1]{0}', space=sflag, size = 0x4, scoped, tag = 'scoped memory for custom-call']
    %2 = vsyncpa [#allocation0], 0
    %s3 = sshll.u32 %s1, 4
    %s4 = int_to_ptr.vmem [resolvable:$true] %s3
    %6 = dma.hbm_to_vmem [thread:$0]  %s0, 4096, %s4, [#allocation0]
    %7 = dma.done [#allocation0], 4096
    %8 = vsyncpa [#allocation0], 1

// kernel: custom-call.1
$region0: #{custom-call.1}
  %s0 = inlined_call_operand.hbm [shape: c64[4,4,4,4,4], index: 0, kind: input, shape index: {}]
  %s1 = inlined_call_operand.vmem [shape: f32[4,4,4,4,4], index: 1, kind: output, shape index: {}]
  %s2 = scalar_lea.hbm %s0, 4096
  $region1: #{custom-call.1} parent=0
    #allocation0 [shape = 's32[1]{0}', space=sflag, size = 0x4, scoped, tag = 'scoped memory for custom-call.1']
    %3 = vsyncpa [#allocation0], 0
    %s4 = sshll.u32 %s1, 4
    %s5 = int_to_ptr.vmem [resolvable:$true] %s4
    %7 = dma.hbm_to_vmem [thread:$0]  %s2, 4096, %s5, [#allocation0]
    %8 = dma.done [#allocation0], 4096
    %9 = vsyncpa [#allocation0], 1

// kernel: spectral_conv3d.1
$region0: #{spectral_conv3d.1}
  #allocation0 [shape = 'u32[]', space=smem, size = 0x4, offset = 0x4, fixed_abs, tag = 'smem constant byte address 0x4 - core index']
  #allocation1 [shape = 'u32[144,128]{1,0:T(1,128)}', space=vmem, size = 0x12000, scoped, tag = 'internal scratch']
  %s0 = inlined_call_operand.vmem [shape: f32[2,2,4,128], index: 0, kind: input, shape index: {}]
  %s1 = inlined_call_operand.vmem [shape: f32[2,4,4,128], index: 1, kind: input, shape index: {}]
  %s2 = inlined_call_operand.vmem [shape: f32[2,2,4,128], index: 2, kind: output, shape index: {}]
  %s3 = sld [smem:[#allocation0]]
  $region26: #{spectral_conv3d.1} parent=0
    _
  %s5 = ssub.s32 1, %s3
  %s6 = scalar_select 0, %s5, %s3
  // Predicated region
  $region2: #{spectral_conv3d.1} parent=0 // pred_check
    _
  $region3: #{spectral_conv3d.1} parent=0 // pred_check_branch
    %8 = sbr.rel (0) target = $region5
  $region4: #{spectral_conv3d.1} parent=0 // pred_region
    _
  $region5: #{spectral_conv3d.1} parent=0 // pred_fallthru
    _
  // Predicated region
  $region6: #{spectral_conv3d.1} parent=0 // pred_check
    _
  $region7: #{spectral_conv3d.1} parent=0 // pred_check_branch
    %10 = sbr.rel (0) target = $region9
  $region8: #{spectral_conv3d.1} parent=0 // pred_region
    _
  $region9: #{spectral_conv3d.1} parent=0 // pred_fallthru
    _
  %v11 = vld [vmem:[%s0] sm:$0x1]
  %v12 = vld [vmem:[%s0 + $0x4] sm:$0x1]
  %s13 = scalar_lea.vmem %s0, 8
  %v14 = vld [vmem:[%s13] sm:$0x1]
  %v15 = vld [vmem:[%s13 + $0x4] sm:$0x1]
  %v16 = vld [vmem:[%s1] sm:$0xf]
  %s17 = scalar_lea.vmem %s1, 16
  %v18 = vld [vmem:[%s17] sm:$0xf]
  %v19 = vlaneseq
  %v20 = vshrl.u32 %v19, 7
  %v21 = vsub.s32 0, %v20
  %v22 = vrot.slane %v11, %v21
  %v23 = vlaneseq
  %v24 = vshrl.u32 %v23, 7
  %v25 = vsub.s32 0, %v24
  %v26 = vrot.slane %v12, %v25
  %v27 = vmul.f32 %v22, %v16
  %v28 = vmul.f32 %v26, %v16
  %v29 = vlaneseq
  %v30 = vshrl.u32 %v29, 7
  %v31 = vsub.s32 0, %v30
  %v32 = vrot.slane %v14, %v31
  %v33 = vlaneseq
  %v34 = vshrl.u32 %v33, 7
  %v35 = vsub.s32 0, %v34
  %v36 = vrot.slane %v15, %v35
  %v37 = vmul.f32 %v32, %v18
  %v38 = vmul.f32 %v36, %v18
  %v39 = vsub.f32 %v27, %v37
  %v40 = vsub.f32 %v28, %v38
  %v41 = vadd.f32 %v39, 0.0
  %v42 = vadd.f32 %v40, 0.0
  %v43 = vmul.f32 %v22, %v18
  %v44 = vmul.f32 %v26, %v18
  %v45 = vmul.f32 %v32, %v16
  %v46 = vmul.f32 %v36, %v16
  %v47 = vadd.f32 %v43, %v45
  %v48 = vadd.f32 %v44, %v46
  %v49 = vadd.f32 %v47, 0.0
  %v50 = vadd.f32 %v48, 0.0
  %v51 = vld [vmem:[%s0 + $0x1] sm:$0x1]
  %v52 = vld [vmem:[%s0 + $0x5] sm:$0x1]
  %v53 = vld [vmem:[%s13 + $0x1] sm:$0x1]
  %v54 = vld [vmem:[%s13 + $0x5] sm:$0x1]
  %s55 = scalar_lea.vmem %s1, 4
  %v56 = vld [vmem:[%s55] sm:$0xf]
  %s57 = scalar_lea.vmem %s1, 20
  %v58 = vld [vmem:[%s57] sm:$0xf]
  %v59 = vlaneseq
  %v60 = vshrl.u32 %v59, 7
  %v61 = vsub.s32 0, %v60
  %v62 = vrot.slane %v51, %v61
  %v63 = vlaneseq
  %v64 = vshrl.u32 %v63, 7
  %v65 = vsub.s32 0, %v64
  %v66 = vrot.slane %v52, %v65
  %v67 = vmul.f32 %v62, %v56
  %v68 = vmul.f32 %v66, %v56
  %v69 = vlaneseq
  %v70 = vshrl.u32 %v69, 7
  %v71 = vsub.s32 0, %v70
  %v72 = vrot.slane %v53, %v71
  %v73 = vlaneseq
  %v74 = vshrl.u32 %v73, 7
  %v75 = vsub.s32 0, %v74
  %v76 = vrot.slane %v54, %v75
  %v77 = vmul.f32 %v72, %v58
  %v78 = vmul.f32 %v76, %v58
  %v79 = vsub.f32 %v67, %v77
  %v80 = vsub.f32 %v68, %v78
  %v81 = vadd.f32 %v41, %v79
  %v82 = vadd.f32 %v42, %v80
  %v83 = vmul.f32 %v62, %v58
  %v84 = vmul.f32 %v66, %v58
  %v85 = vmul.f32 %v72, %v56
  %v86 = vmul.f32 %v76, %v56
  %v87 = vadd.f32 %v83, %v85
  %v88 = vadd.f32 %v84, %v86
  %v89 = vadd.f32 %v49, %v87
  %v90 = vadd.f32 %v50, %v88
  %v91 = vld [vmem:[%s0 + $0x2] sm:$0x1]
  %v92 = vld [vmem:[%s0 + $0x6] sm:$0x1]
  %v93 = vld [vmem:[%s13 + $0x2] sm:$0x1]
  %v94 = vld [vmem:[%s13 + $0x6] sm:$0x1]
  %s95 = scalar_lea.vmem %s1, 8
  %v96 = vld [vmem:[%s95] sm:$0xf]
  %s97 = scalar_lea.vmem %s1, 24
  %v98 = vld [vmem:[%s97] sm:$0xf]
  %v99 = vlaneseq
  %v100 = vshrl.u32 %v99, 7
  %v101 = vsub.s32 0, %v100
  %v102 = vrot.slane %v91, %v101
  %v103 = vlaneseq
  %v104 = vshrl.u32 %v103, 7
  %v105 = vsub.s32 0, %v104
  %v106 = vrot.slane %v92, %v105
  %v107 = vmul.f32 %v102, %v96
  %v108 = vmul.f32 %v106, %v96
  %v109 = vlaneseq
  %v110 = vshrl.u32 %v109, 7
  %v111 = vsub.s32 0, %v110
  %v112 = vrot.slane %v93, %v111
  %v113 = vlaneseq
  %v114 = vshrl.u32 %v113, 7
  %v115 = vsub.s32 0, %v114
  %v116 = vrot.slane %v94, %v115
  %v117 = vmul.f32 %v112, %v98
  %v118 = vmul.f32 %v116, %v98
  %v119 = vsub.f32 %v107, %v117
  %v120 = vsub.f32 %v108, %v118
  %v121 = vadd.f32 %v81, %v119
  %v122 = vadd.f32 %v82, %v120
  %v123 = vmul.f32 %v102, %v98
  %v124 = vmul.f32 %v106, %v98
  %v125 = vmul.f32 %v112, %v96
  %v126 = vmul.f32 %v116, %v96
  %v127 = vadd.f32 %v123, %v125
  %v128 = vadd.f32 %v124, %v126
  %v129 = vadd.f32 %v89, %v127
  %v130 = vadd.f32 %v90, %v128
  %v131 = vld [vmem:[%s0 + $0x3] sm:$0x1]
  %v132 = vld [vmem:[%s0 + $0x7] sm:$0x1]
  %v133 = vld [vmem:[%s13 + $0x3] sm:$0x1]
  %v134 = vld [vmem:[%s13 + $0x7] sm:$0x1]
  %s135 = scalar_lea.vmem %s1, 12
  %v136 = vld [vmem:[%s135] sm:$0xf]
  %s137 = scalar_lea.vmem %s1, 28
  %v138 = vld [vmem:[%s137] sm:$0xf]
  %v139 = vlaneseq
  %v140 = vshrl.u32 %v139, 7
  %v141 = vsub.s32 0, %v140
  %v142 = vrot.slane %v131, %v141
  %v143 = vlaneseq
  %v144 = vshrl.u32 %v143, 7
  %v145 = vsub.s32 0, %v144
  %v146 = vrot.slane %v132, %v145
  %v147 = vmul.f32 %v142, %v136
  %v148 = vmul.f32 %v146, %v136
  %v149 = vlaneseq
  %v150 = vshrl.u32 %v149, 7
  %v151 = vsub.s32 0, %v150
  %v152 = vrot.slane %v133, %v151
  %v153 = vlaneseq
  %v154 = vshrl.u32 %v153, 7
  %v155 = vsub.s32 0, %v154
  %v156 = vrot.slane %v134, %v155
  %v157 = vmul.f32 %v152, %v138
  %v158 = vmul.f32 %v156, %v138
  %v159 = vsub.f32 %v147, %v157
  %v160 = vsub.f32 %v148, %v158
  %v161 = vadd.f32 %v121, %v159
  %v162 = vadd.f32 %v122, %v160
  %v163 = vmul.f32 %v142, %v138
  %v164 = vmul.f32 %v146, %v138
  %v165 = vmul.f32 %v152, %v136
  %v166 = vmul.f32 %v156, %v136
  %v167 = vadd.f32 %v163, %v165
  %v168 = vadd.f32 %v164, %v166
  %v169 = vadd.f32 %v129, %v167
  %v170 = vadd.f32 %v130, %v168
  %p171 = scmp.eq.s32.totalorder 0, 0
  // Predicated region
  $region10: #{spectral_conv3d.1} parent=0 // pred_check
    %p172 = pneg %p171
  $region11: #{spectral_conv3d.1} parent=0 // pred_check_branch
    %174 = sbr.rel (%p172) target = $region13
  $region12: #{spectral_conv3d.1} parent=0 // pred_region
    %175 = vst [vmem:[%s2] sm:$0xf] %v161
    %176 = vst [vmem:[%s2 + $0x4] sm:$0xf] %v162
    %s177 = scalar_lea.vmem %s2, 8
    %178 = vst [vmem:[%s177] sm:$0xf] %v169
    %179 = vst [vmem:[%s177 + $0x4] sm:$0xf] %v170
  $region13: #{spectral_conv3d.1} parent=0 // pred_fallthru
    _
  %p180 = scmp.ne.s32.totalorder 0, 0
  // Predicated region
  $region14: #{spectral_conv3d.1} parent=0 // pred_check
    %p181 = pneg %p180
  $region15: #{spectral_conv3d.1} parent=0 // pred_check_branch
    %183 = sbr.rel (%p181) target = $region17
  $region16: #{spectral_conv3d.1} parent=0 // pred_region
    %v184 = vld [vmem:[%s2] sm:$0xf]
    %v185 = vld [vmem:[%s2 + $0x4] sm:$0xf]
    %v186 = vadd.f32 %v184, %v161
    %v187 = vadd.f32 %v185, %v162
    %188 = vst [vmem:[%s2] sm:$0xf] %v186
    %189 = vst [vmem:[%s2 + $0x4] sm:$0xf] %v187
    %s190 = scalar_lea.vmem %s2, 8
    %v191 = vld [vmem:[%s190] sm:$0xf]
    %v192 = vld [vmem:[%s190 + $0x4] sm:$0xf]
    %v193 = vadd.f32 %v191, %v169
    %v194 = vadd.f32 %v192, %v170
    %195 = vst [vmem:[%s190] sm:$0xf] %v193
    %196 = vst [vmem:[%s190 + $0x4] sm:$0xf] %v194
  $region17: #{spectral_conv3d.1} parent=0 // pred_fallthru
    _
  // Predicated region
  $region18: #{spectral_conv3d.1} parent=0 // pred_check
    _
  $region19: #{spectral_conv3d.1} parent=0 // pred_check_branch
    %198 = sbr.rel (0) target = $region21
  $region20: #{spectral_conv3d.1} parent=0 // pred_region
    _
  $region21: #{spectral_conv3d.1} parent=0 // pred_fallthru
    _
  // Predicated region
  $region22: #{spectral_conv3d.1} parent=0 // pred_check
    _
  $region23: #{spectral_conv3d.1} parent=0 // pred_check_branch
    %200 = sbr.rel (0) target = $region25
  $region24: #{spectral_conv3d.1} parent=0 // pred_region
    _
  $region25: #{spectral_conv3d.1} parent=0 // pred_fallthru
    _

// kernel: reverse.1
$region0: #{reverse.1}
  #allocation0 [shape = 's32[1]{0}', space=sflag, size = 0x4, scoped, tag = 'scoped memory for reverse.1']
  %s0 = inlined_call_operand.vmem [shape: f32[2,4,16,16,7], index: 0, kind: input, shape index: {}]
  %s1 = inlined_call_operand.vmem [shape: f32[2,4,16,16,7], index: 1, kind: output, shape index: {}]
  %s2 = scalar_lea.vmem %s0, 96
  %v3 = vld [vmem:[%s2] sm:$0xff]
  %4 = vst [vmem:[%s1] sm:$0xff] %v3
  %s5 = scalar_lea.vmem %s0, 544
  %v6 = vld [vmem:[%s5] sm:$0xff]
  %s7 = scalar_lea.vmem %s1, 448
  %8 = vst [vmem:[%s7] sm:$0xff] %v6
  %s9 = scalar_lea.vmem %s0, 208
  %v10 = vld [vmem:[%s9] sm:$0xff]
  %s11 = scalar_lea.vmem %s1, 112
  %12 = vst [vmem:[%s11] sm:$0xff] %v10
  %s13 = scalar_lea.vmem %s0, 656
  %v14 = vld [vmem:[%s13] sm:$0xff]
  %s15 = scalar_lea.vmem %s1, 560
  %16 = vst [vmem:[%s15] sm:$0xff] %v14
  %s17 = scalar_lea.vmem %s0, 320
  %v18 = vld [vmem:[%s17] sm:$0xff]
  %s19 = scalar_lea.vmem %s1, 224
  %20 = vst [vmem:[%s19] sm:$0xff] %v18
  %s21 = scalar_lea.vmem %s0, 768
  %v22 = vld [vmem:[%s21] sm:$0xff]
  %s23 = scalar_lea.vmem %s1, 672
  %24 = vst [vmem:[%s23] sm:$0xff] %v22
  %s25 = scalar_lea.vmem %s0, 432
  %v26 = vld [vmem:[%s25] sm:$0xff]
  %s27 = scalar_lea.vmem %s1, 336
  %28 = vst [vmem:[%s27] sm:$0xff] %v26
  %s29 = scalar_lea.vmem %s0, 880
  %v30 = vld [vmem:[%s29] sm:$0xff]
  %s31 = scalar_lea.vmem %s1, 784
  %32 = vst [vmem:[%s31] sm:$0xff] %v30
  %s33 = scalar_lea.vmem %s0, 80
  %v34 = vld [vmem:[%s33] sm:$0xff]
  %s35 = scalar_lea.vmem %s1, 16
  %36 = vst [vmem:[%s35] sm:$0xff] %v34
  %s37 = scalar_lea.vmem %s0, 528
  %v38 = vld [vmem:[%s37] sm:$0xff]
  %s39 = scalar_lea.vmem %s1, 464
  %40 = vst [vmem:[%s39] sm:$0xff] %v38
  %s41 = scalar_lea.vmem %s0, 192
  %v42 = vld [vmem:[%s41] sm:$0xff]
  %s43 = scalar_lea.vmem %s1, 128
  %44 = vst [vmem:[%s43] sm:$0xff] %v42
  %s45 = scalar_lea.vmem %s0, 640
  %v46 = vld [vmem:[%s45] sm:$0xff]
  %s47 = scalar_lea.vmem %s1, 576
  %48 = vst [vmem:[%s47] sm:$0xff] %v46
  %s49 = scalar_lea.vmem %s0, 304
  %v50 = vld [vmem:[%s49] sm:$0xff]
  %s51 = scalar_lea.vmem %s1, 240
  %52 = vst [vmem:[%s51] sm:$0xff] %v50
  %s53 = scalar_lea.vmem %s0, 752
  %v54 = vld [vmem:[%s53] sm:$0xff]
  %s55 = scalar_lea.vmem %s1, 688
  %56 = vst [vmem:[%s55] sm:$0xff] %v54
  %s57 = scalar_lea.vmem %s0, 416
  %v58 = vld [vmem:[%s57] sm:$0xff]
  %s59 = scalar_lea.vmem %s1, 352
  %60 = vst [vmem:[%s59] sm:$0xff] %v58
  %s61 = scalar_lea.vmem %s0, 864
  %v62 = vld [vmem:[%s61] sm:$0xff]
  %s63 = scalar_lea.vmem %s1, 800
  %64 = vst [vmem:[%s63] sm:$0xff] %v62
  %s65 = scalar_lea.vmem %s0, 64
  %v66 = vld [vmem:[%s65] sm:$0xff]
  %s67 = scalar_lea.vmem %s1, 32
  %68 = vst [vmem:[%s67] sm:$0xff] %v66
  %s69 = scalar_lea.vmem %s0, 512
  %v70 = vld [vmem:[%s69] sm:$0xff]
  %s71 = scalar_lea.vmem %s1, 480
  %72 = vst [vmem:[%s71] sm:$0xff] %v70
  %s73 = scalar_lea.vmem %s0, 176
  %v74 = vld [vmem:[%s73] sm:$0xff]
  %s75 = scalar_lea.vmem %s1, 144
  %76 = vst [vmem:[%s75] sm:$0xff] %v74
  %s77 = scalar_lea.vmem %s0, 624
  %v78 = vld [vmem:[%s77] sm:$0xff]
  %s79 = scalar_lea.vmem %s1, 592
  %80 = vst [vmem:[%s79] sm:$0xff] %v78
  %s81 = scalar_lea.vmem %s0, 288
  %v82 = vld [vmem:[%s81] sm:$0xff]
  %s83 = scalar_lea.vmem %s1, 256
  %84 = vst [vmem:[%s83] sm:$0xff] %v82
  %s85 = scalar_lea.vmem %s0, 736
  %v86 = vld [vmem:[%s85] sm:$0xff]
  %s87 = scalar_lea.vmem %s1, 704
  %88 = vst [vmem:[%s87] sm:$0xff] %v86
  %s89 = scalar_lea.vmem %s0, 400
  %v90 = vld [vmem:[%s89] sm:$0xff]
  %s91 = scalar_lea.vmem %s1, 368
  %92 = vst [vmem:[%s91] sm:$0xff] %v90
  %s93 = scalar_lea.vmem %s0, 848
  %v94 = vld [vmem:[%s93] sm:$0xff]
  %s95 = scalar_lea.vmem %s1, 816
  %96 = vst [vmem:[%s95] sm:$0xff] %v94
  %s97 = scalar_lea.vmem %s0, 48
  %v98 = vld [vmem:[%s97] sm:$0xff]
  %s99 = scalar_lea.vmem %s1, 48
  %100 = vst [vmem:[%s99] sm:$0xff] %v98
  %s101 = scalar_lea.vmem %s0, 496
  %v102 = vld [vmem:[%s101] sm:$0xff]
  %s103 = scalar_lea.vmem %s1, 496
  %104 = vst [vmem:[%s103] sm:$0xff] %v102
  %s105 = scalar_lea.vmem %s0, 160
  %v106 = vld [vmem:[%s105] sm:$0xff]
  %s107 = scalar_lea.vmem %s1, 160
  %108 = vst [vmem:[%s107] sm:$0xff] %v106
  %s109 = scalar_lea.vmem %s0, 608
  %v110 = vld [vmem:[%s109] sm:$0xff]
  %s111 = scalar_lea.vmem %s1, 608
  %112 = vst [vmem:[%s111] sm:$0xff] %v110
  %s113 = scalar_lea.vmem %s0, 272
  %v114 = vld [vmem:[%s113] sm:$0xff]
  %s115 = scalar_lea.vmem %s1, 272
  %116 = vst [vmem:[%s115] sm:$0xff] %v114
  %s117 = scalar_lea.vmem %s0, 720
  %v118 = vld [vmem:[%s117] sm:$0xff]
  %s119 = scalar_lea.vmem %s1, 720
  %120 = vst [vmem:[%s119] sm:$0xff] %v118
  %s121 = scalar_lea.vmem %s0, 384
  %v122 = vld [vmem:[%s121] sm:$0xff]
  %s123 = scalar_lea.vmem %s1, 384
  %124 = vst [vmem:[%s123] sm:$0xff] %v122
  %s125 = scalar_lea.vmem %s0, 832
  %v126 = vld [vmem:[%s125] sm:$0xff]
  %s127 = scalar_lea.vmem %s1, 832
  %128 = vst [vmem:[%s127] sm:$0xff] %v126
  %s129 = scalar_lea.vmem %s0, 32
  %v130 = vld [vmem:[%s129] sm:$0xff]
  %s131 = scalar_lea.vmem %s1, 64
  %132 = vst [vmem:[%s131] sm:$0xff] %v130
  %s133 = scalar_lea.vmem %s0, 480
  %v134 = vld [vmem:[%s133] sm:$0xff]
  %s135 = scalar_lea.vmem %s1, 512
  %136 = vst [vmem:[%s135] sm:$0xff] %v134
  %s137 = scalar_lea.vmem %s0, 144
  %v138 = vld [vmem:[%s137] sm:$0xff]
  %s139 = scalar_lea.vmem %s1, 176
  %140 = vst [vmem:[%s139] sm:$0xff] %v138
  %s141 = scalar_lea.vmem %s0, 592
  %v142 = vld [vmem:[%s141] sm:$0xff]
  %s143 = scalar_lea.vmem %s1, 624
  %144 = vst [vmem:[%s143] sm:$0xff] %v142
  %s145 = scalar_lea.vmem %s0, 256
  %v146 = vld [vmem:[%s145] sm:$0xff]
  %s147 = scalar_lea.vmem %s1, 288
  %148 = vst [vmem:[%s147] sm:$0xff] %v146
  %s149 = scalar_lea.vmem %s0, 704
  %v150 = vld [vmem:[%s149] sm:$0xff]
  %s151 = scalar_lea.vmem %s1, 736
  %152 = vst [vmem:[%s151] sm:$0xff] %v150
  %s153 = scalar_lea.vmem %s0, 368
  %v154 = vld [vmem:[%s153] sm:$0xff]
  %s155 = scalar_lea.vmem %s1, 400
  %156 = vst [vmem:[%s155] sm:$0xff] %v154
  %s157 = scalar_lea.vmem %s0, 816
  %v158 = vld [vmem:[%s157] sm:$0xff]
  %s159 = scalar_lea.vmem %s1, 848
  %160 = vst [vmem:[%s159] sm:$0xff] %v158
  %s161 = scalar_lea.vmem %s0, 16
  %v162 = vld [vmem:[%s161] sm:$0xff]
  %s163 = scalar_lea.vmem %s1, 80
  %164 = vst [vmem:[%s163] sm:$0xff] %v162
  %s165 = scalar_lea.vmem %s0, 464
  %v166 = vld [vmem:[%s165] sm:$0xff]
  %s167 = scalar_lea.vmem %s1, 528
  %168 = vst [vmem:[%s167] sm:$0xff] %v166
  %s169 = scalar_lea.vmem %s0, 128
  %v170 = vld [vmem:[%s169] sm:$0xff]
  %s171 = scalar_lea.vmem %s1, 192
  %172 = vst [vmem:[%s171] sm:$0xff] %v170
  %s173 = scalar_lea.vmem %s0, 576
  %v174 = vld [vmem:[%s173] sm:$0xff]
  %s175 = scalar_lea.vmem %s1, 640
  %176 = vst [vmem:[%s175] sm:$0xff] %v174
  %s177 = scalar_lea.vmem %s0, 240
  %v178 = vld [vmem:[%s177] sm:$0xff]
  %s179 = scalar_lea.vmem %s1, 304
  %180 = vst [vmem:[%s179] sm:$0xff] %v178
  %s181 = scalar_lea.vmem %s0, 688
  %v182 = vld [vmem:[%s181] sm:$0xff]
  %s183 = scalar_lea.vmem %s1, 752
  %184 = vst [vmem:[%s183] sm:$0xff] %v182
  %s185 = scalar_lea.vmem %s0, 352
  %v186 = vld [vmem:[%s185] sm:$0xff]
  %s187 = scalar_lea.vmem %s1, 416
  %188 = vst [vmem:[%s187] sm:$0xff] %v186
  %s189 = scalar_lea.vmem %s0, 800
  %v190 = vld [vmem:[%s189] sm:$0xff]
  %s191 = scalar_lea.vmem %s1, 864
  %192 = vst [vmem:[%s191] sm:$0xff] %v190
  %v193 = vld [vmem:[%s0] sm:$0xff]
  %s194 = scalar_lea.vmem %s1, 96
  %195 = vst [vmem:[%s194] sm:$0xff] %v193
  %s196 = scalar_lea.vmem %s0, 448
  %v197 = vld [vmem:[%s196] sm:$0xff]
  %s198 = scalar_lea.vmem %s1, 544
  %199 = vst [vmem:[%s198] sm:$0xff] %v197
  %s200 = scalar_lea.vmem %s0, 112
  %v201 = vld [vmem:[%s200] sm:$0xff]
  %s202 = scalar_lea.vmem %s1, 208
  %203 = vst [vmem:[%s202] sm:$0xff] %v201
  %s204 = scalar_lea.vmem %s0, 560
  %v205 = vld [vmem:[%s204] sm:$0xff]
  %s206 = scalar_lea.vmem %s1, 656
  %207 = vst [vmem:[%s206] sm:$0xff] %v205
  %s208 = scalar_lea.vmem %s0, 224
  %v209 = vld [vmem:[%s208] sm:$0xff]
  %s210 = scalar_lea.vmem %s1, 320
  %211 = vst [vmem:[%s210] sm:$0xff] %v209
  %s212 = scalar_lea.vmem %s0, 672
  %v213 = vld [vmem:[%s212] sm:$0xff]
  %s214 = scalar_lea.vmem %s1, 768
  %215 = vst [vmem:[%s214] sm:$0xff] %v213
  %s216 = scalar_lea.vmem %s0, 336
  %v217 = vld [vmem:[%s216] sm:$0xff]
  %s218 = scalar_lea.vmem %s1, 432
  %219 = vst [vmem:[%s218] sm:$0xff] %v217
  %s220 = scalar_lea.vmem %s0, 784
  %v221 = vld [vmem:[%s220] sm:$0xff]
  %s222 = scalar_lea.vmem %s1, 880
  %223 = vst [vmem:[%s222] sm:$0xff] %v221
  %s224 = scalar_lea.vmem %s0, 104
  %v225 = vld [vmem:[%s224] sm:$0xff]
  %s226 = scalar_lea.vmem %s1, 8
  %227 = vst [vmem:[%s226] sm:$0xff] %v225
  %s228 = scalar_lea.vmem %s0, 552
  %v229 = vld [vmem:[%s228] sm:$0xff]
  %s230 = scalar_lea.vmem %s1, 456
  %231 = vst [vmem:[%s230] sm:$0xff] %v229
  %s232 = scalar_lea.vmem %s0, 216
  %v233 = vld [vmem:[%s232] sm:$0xff]
  %s234 = scalar_lea.vmem %s1, 120
  %235 = vst [vmem:[%s234] sm:$0xff] %v233
  %s236 = scalar_lea.vmem %s0, 664
  %v237 = vld [vmem:[%s236] sm:$0xff]
  %s238 = scalar_lea.vmem %s1, 568
  %239 = vst [vmem:[%s238] sm:$0xff] %v237
  %s240 = scalar_lea.vmem %s0, 328
  %v241 = vld [vmem:[%s240] sm:$0xff]
  %s242 = scalar_lea.vmem %s1, 232
  %243 = vst [vmem:[%s242] sm:$0xff] %v241
  %s244 = scalar_lea.vmem %s0, 776
  %v245 = vld [vmem:[%s244] sm:$0xff]
  %s246 = scalar_lea.vmem %s1, 680
  %247 = vst [vmem:[%s246] sm:$0xff] %v245
  %s248 = scalar_lea.vmem %s0, 440
  %v249 = vld [vmem:[%s248] sm:$0xff]
  %s250 = scalar_lea.vmem %s1, 344
  %251 = vst [vmem:[%s250] sm:$0xff] %v249
  %s252 = scalar_lea.vmem %s0, 888
  %v253 = vld [vmem:[%s252] sm:$0xff]
  %s254 = scalar_lea.vmem %s1, 792
  %255 = vst [vmem:[%s254] sm:$0xff] %v253
  %s256 = scalar_lea.vmem %s0, 88
  %v257 = vld [vmem:[%s256] sm:$0xff]
  %s258 = scalar_lea.vmem %s1, 24
  %259 = vst [vmem:[%s258] sm:$0xff] %v257
  %s260 = scalar_lea.vmem %s0, 536
  %v261 = vld [vmem:[%s260] sm:$0xff]
  %s262 = scalar_lea.vmem %s1, 472
  %263 = vst [vmem:[%s262] sm:$0xff] %v261
  %s264 = scalar_lea.vmem %s0, 200
  %v265 = vld [vmem:[%s264] sm:$0xff]
  %s266 = scalar_lea.vmem %s1, 136
  %267 = vst [vmem:[%s266] sm:$0xff] %v265
  %s268 = scalar_lea.vmem %s0, 648
  %v269 = vld [vmem:[%s268] sm:$0xff]
  %s270 = scalar_lea.vmem %s1, 584
  %271 = vst [vmem:[%s270] sm:$0xff] %v269
  %s272 = scalar_lea.vmem %s0, 312
  %v273 = vld [vmem:[%s272] sm:$0xff]
  %s274 = scalar_lea.vmem %s1, 248
  %275 = vst [vmem:[%s274] sm:$0xff] %v273
  %s276 = scalar_lea.vmem %s0, 760
  %v277 = vld [vmem:[%s276] sm:$0xff]
  %s278 = scalar_lea.vmem %s1, 696
  %279 = vst [vmem:[%s278] sm:$0xff] %v277
  %s280 = scalar_lea.vmem %s0, 424
  %v281 = vld [vmem:[%s280] sm:$0xff]
  %s282 = scalar_lea.vmem %s1, 360
  %283 = vst [vmem:[%s282] sm:$0xff] %v281
  %s284 = scalar_lea.vmem %s0, 872
  %v285 = vld [vmem:[%s284] sm:$0xff]
  %s286 = scalar_lea.vmem %s1, 808
  %287 = vst [vmem:[%s286] sm:$0xff] %v285
  %s288 = scalar_lea.vmem %s0, 72
  %v289 = vld [vmem:[%s288] sm:$0xff]
  %s290 = scalar_lea.vmem %s1, 40
  %291 = vst [vmem:[%s290] sm:$0xff] %v289
  %s292 = scalar_lea.vmem %s0, 520
  %v293 = vld [vmem:[%s292] sm:$0xff]
  %s294 = scalar_lea.vmem %s1, 488
  %295 = vst [vmem:[%s294] sm:$0xff] %v293
  %s296 = scalar_lea.vmem %s0, 184
  %v297 = vld [vmem:[%s296] sm:$0xff]
  %s298 = scalar_lea.vmem %s1, 152
  %299 = vst [vmem:[%s298] sm:$0xff] %v297
  %s300 = scalar_lea.vmem %s0, 632
  %v301 = vld [vmem:[%s300] sm:$0xff]
  %s302 = scalar_lea.vmem %s1, 600
  %303 = vst [vmem:[%s302] sm:$0xff] %v301
  %s304 = scalar_lea.vmem %s0, 296
  %v305 = vld [vmem:[%s304] sm:$0xff]
  %s306 = scalar_lea.vmem %s1, 264
  %307 = vst [vmem:[%s306] sm:$0xff] %v305
  %s308 = scalar_lea.vmem %s0, 744
  %v309 = vld [vmem:[%s308] sm:$0xff]
  %s310 = scalar_lea.vmem %s1, 712
  %311 = vst [vmem:[%s310] sm:$0xff] %v309
  %s312 = scalar_lea.vmem %s0, 408
  %v313 = vld [vmem:[%s312] sm:$0xff]
  %s314 = scalar_lea.vmem %s1, 376
  %315 = vst [vmem:[%s314] sm:$0xff] %v313
  %s316 = scalar_lea.vmem %s0, 856
  %v317 = vld [vmem:[%s316] sm:$0xff]
  %s318 = scalar_lea.vmem %s1, 824
  %319 = vst [vmem:[%s318] sm:$0xff] %v317
  %s320 = scalar_lea.vmem %s0, 56
  %v321 = vld [vmem:[%s320] sm:$0xff]
  %s322 = scalar_lea.vmem %s1, 56
  %323 = vst [vmem:[%s322] sm:$0xff] %v321
  %s324 = scalar_lea.vmem %s0, 504
  %v325 = vld [vmem:[%s324] sm:$0xff]
  %s326 = scalar_lea.vmem %s1, 504
  %327 = vst [vmem:[%s326] sm:$0xff] %v325
  %s328 = scalar_lea.vmem %s0, 168
  %v329 = vld [vmem:[%s328] sm:$0xff]
  %s330 = scalar_lea.vmem %s1, 168
  %331 = vst [vmem:[%s330] sm:$0xff] %v329
  %s332 = scalar_lea.vmem %s0, 616
  %v333 = vld [vmem:[%s332] sm:$0xff]
  %s334 = scalar_lea.vmem %s1, 616
  %335 = vst [vmem:[%s334] sm:$0xff] %v333
  %s336 = scalar_lea.vmem %s0, 280
  %v337 = vld [vmem:[%s336] sm:$0xff]
  %s338 = scalar_lea.vmem %s1, 280
  %339 = vst [vmem:[%s338] sm:$0xff] %v337
  %s340 = scalar_lea.vmem %s0, 728
  %v341 = vld [vmem:[%s340] sm:$0xff]
  %s342 = scalar_lea.vmem %s1, 728
  %343 = vst [vmem:[%s342] sm:$0xff] %v341
  %s344 = scalar_lea.vmem %s0, 392
  %v345 = vld [vmem:[%s344] sm:$0xff]
  %s346 = scalar_lea.vmem %s1, 392
  %347 = vst [vmem:[%s346] sm:$0xff] %v345
  %s348 = scalar_lea.vmem %s0, 840
  %v349 = vld [vmem:[%s348] sm:$0xff]
  %s350 = scalar_lea.vmem %s1, 840
  %351 = vst [vmem:[%s350] sm:$0xff] %v349
  %s352 = scalar_lea.vmem %s0, 40
  %v353 = vld [vmem:[%s352] sm:$0xff]
  %s354 = scalar_lea.vmem %s1, 72
  %355 = vst [vmem:[%s354] sm:$0xff] %v353
  %s356 = scalar_lea.vmem %s0, 488
  %v357 = vld [vmem:[%s356] sm:$0xff]
  %s358 = scalar_lea.vmem %s1, 520
  %359 = vst [vmem:[%s358] sm:$0xff] %v357
  %s360 = scalar_lea.vmem %s0, 152
  %v361 = vld [vmem:[%s360] sm:$0xff]
  %s362 = scalar_lea.vmem %s1, 184
  %363 = vst [vmem:[%s362] sm:$0xff] %v361
  %s364 = scalar_lea.vmem %s0, 600
  %v365 = vld [vmem:[%s364] sm:$0xff]
  %s366 = scalar_lea.vmem %s1, 632
  %367 = vst [vmem:[%s366] sm:$0xff] %v365
  %s368 = scalar_lea.vmem %s0, 264
  %v369 = vld [vmem:[%s368] sm:$0xff]
  %s370 = scalar_lea.vmem %s1, 296
  %371 = vst [vmem:[%s370] sm:$0xff] %v369
  %s372 = scalar_lea.vmem %s0, 712
  %v373 = vld [vmem:[%s372] sm:$0xff]
  %s374 = scalar_lea.vmem %s1, 744
  %375 = vst [vmem:[%s374] sm:$0xff] %v373
  %s376 = scalar_lea.vmem %s0, 376
  %v377 = vld [vmem:[%s376] sm:$0xff]
  %s378 = scalar_lea.vmem %s1, 408
  %379 = vst [vmem:[%s378] sm:$0xff] %v377
  %s380 = scalar_lea.vmem %s0, 824
  %v381 = vld [vmem:[%s380] sm:$0xff]
  %s382 = scalar_lea.vmem %s1, 856
  %383 = vst [vmem:[%s382] sm:$0xff] %v381
  %s384 = scalar_lea.vmem %s0, 24
  %v385 = vld [vmem:[%s384] sm:$0xff]
  %s386 = scalar_lea.vmem %s1, 88
  %387 = vst [vmem:[%s386] sm:$0xff] %v385
  %s388 = scalar_lea.vmem %s0, 472
  %v389 = vld [vmem:[%s388] sm:$0xff]
  %s390 = scalar_lea.vmem %s1, 536
  %391 = vst [vmem:[%s390] sm:$0xff] %v389
  %s392 = scalar_lea.vmem %s0, 136
  %v393 = vld [vmem:[%s392] sm:$0xff]
  %s394 = scalar_lea.vmem %s1, 200
  %395 = vst [vmem:[%s394] sm:$0xff] %v393
  %s396 = scalar_lea.vmem %s0, 584
  %v397 = vld [vmem:[%s396] sm:$0xff]
  %s398 = scalar_lea.vmem %s1, 648
  %399 = vst [vmem:[%s398] sm:$0xff] %v397
  %s400 = scalar_lea.vmem %s0, 248
  %v401 = vld [vmem:[%s400] sm:$0xff]
  %s402 = scalar_lea.vmem %s1, 312
  %403 = vst [vmem:[%s402] sm:$0xff] %v401
  %s404 = scalar_lea.vmem %s0, 696
  %v405 = vld [vmem:[%s404] sm:$0xff]
  %s406 = scalar_lea.vmem %s1, 760
  %407 = vst [vmem:[%s406] sm:$0xff] %v405
  %s408 = scalar_lea.vmem %s0, 360
  %v409 = vld [vmem:[%s408] sm:$0xff]
  %s410 = scalar_lea.vmem %s1, 424
  %411 = vst [vmem:[%s410] sm:$0xff] %v409
  %s412 = scalar_lea.vmem %s0, 808
  %v413 = vld [vmem:[%s412] sm:$0xff]
  %s414 = scalar_lea.vmem %s1, 872
  %415 = vst [vmem:[%s414] sm:$0xff] %v413
  %s416 = scalar_lea.vmem %s0, 8
  %v417 = vld [vmem:[%s416] sm:$0xff]
  %s418 = scalar_lea.vmem %s1, 104
  %419 = vst [vmem:[%s418] sm:$0xff] %v417
  %s420 = scalar_lea.vmem %s0, 456
  %v421 = vld [vmem:[%s420] sm:$0xff]
  %s422 = scalar_lea.vmem %s1, 552
  %423 = vst [vmem:[%s422] sm:$0xff] %v421
  %s424 = scalar_lea.vmem %s0, 120
  %v425 = vld [vmem:[%s424] sm:$0xff]
  %s426 = scalar_lea.vmem %s1, 216
  %427 = vst [vmem:[%s426] sm:$0xff] %v425
  %s428 = scalar_lea.vmem %s0, 568
  %v429 = vld [vmem:[%s428] sm:$0xff]
  %s430 = scalar_lea.vmem %s1, 664
  %431 = vst [vmem:[%s430] sm:$0xff] %v429
  %s432 = scalar_lea.vmem %s0, 232
  %v433 = vld [vmem:[%s432] sm:$0xff]
  %s434 = scalar_lea.vmem %s1, 328
  %435 = vst [vmem:[%s434] sm:$0xff] %v433
  %s436 = scalar_lea.vmem %s0, 680
  %v437 = vld [vmem:[%s436] sm:$0xff]
  %s438 = scalar_lea.vmem %s1, 776
  %439 = vst [vmem:[%s438] sm:$0xff] %v437
  %s440 = scalar_lea.vmem %s0, 344
  %v441 = vld [vmem:[%s440] sm:$0xff]
  %s442 = scalar_lea.vmem %s1, 440
  %443 = vst [vmem:[%s442] sm:$0xff] %v441
  %s444 = scalar_lea.vmem %s0, 792
  %v445 = vld [vmem:[%s444] sm:$0xff]
  %s446 = scalar_lea.vmem %s1, 888
  %447 = vst [vmem:[%s446] sm:$0xff] %v445

</llo_original>
